<compile_context>
chip_gen: v6e
topology: v6e:2x2x1
jax: 0.10.0
libtpu: 0.0.40
codegen_flags: <defaults>
</compile_context>

<pallas_src>
import functools

import jax
import jax.numpy as jnp
from jax import lax
from jax.experimental import pallas as pl
from jax.experimental.pallas import tpu as pltpu


# --------------------------------------------------------------------------
# Prologue: batch-invariant work, computed once.
#   outputs: s1 = softmax(elu(e @ e.T), dim=0)            (N, N)
#            wb = e @ [weights_pool_flat | bias_pool]      (N, K*I*O + O)
# --------------------------------------------------------------------------
def _prologue_kernel(emb_ref, lnw_ref, lnb_ref, pool_ref, s1_ref, wb_ref):
    # LayerNorm(embed_dim), eps=1e-12 (dropout = identity in eval).
    emb = emb_ref[...]                                           # (N, D)
    mean = jnp.mean(emb, axis=-1, keepdims=True)
    cen = emb - mean
    var = jnp.mean(cen * cen, axis=-1, keepdims=True)
    e = cen * lax.rsqrt(var + 1e-12)
    e = e * lnw_ref[...] + lnb_ref[...]                          # (N, D)

    # supports = softmax(elu(e @ e.T), dim=0)
    logits = lax.dot_general(e, e, (((1,), (1,)), ((), ())),
                             preferred_element_type=jnp.float32)  # (N, N)
    elu = jnp.where(logits > 0.0, logits,
                    jnp.exp(jnp.minimum(logits, 0.0)) - 1.0)
    m = jnp.max(elu, axis=0, keepdims=True)                       # softmax over rows
    p = jnp.exp(elu - m)
    denom = jnp.sum(p, axis=0, keepdims=True)
    s1_ref[...] = p / denom                                       # exact divide

    # Fused per-node weights + bias: one MXU call.
    wb_ref[...] = jnp.dot(e, pool_ref[...],
                          preferred_element_type=jnp.float32)     # (N, K*I*O + O)


# --------------------------------------------------------------------------
# Main kernel: per batch-tile graph conv with batch folded into lanes.
#   xt block   : (N, TB*I)    lanes ordered (b, i)
#   out block  : (N, TB*O)    lanes ordered (b, o)
# --------------------------------------------------------------------------
def _gconv_kernel(s1_ref, wb_ref, exp_ref, red_ref, xt_ref, out_ref, xg_ref,
                  *, I, O, K, TB):
    L = TB * I
    KIO = K * I * O

    s1 = s1_ref[...]                                              # (N, N)
    x_t = xt_ref[...]                                             # (N, TB*I)

    # Chebyshev recurrence applied directly to x; z_k written into VMEM scratch.
    xg_ref[:, 0:L] = x_t
    z1 = jnp.dot(s1, x_t, preferred_element_type=jnp.float32)
    xg_ref[:, L:2 * L] = z1
    z_prev2, z_prev1 = x_t, z1
    for k in range(2, K):
        z = 2.0 * jnp.dot(s1, z_prev1,
                          preferred_element_type=jnp.float32) - z_prev2
        xg_ref[:, k * L:(k + 1) * L] = z
        z_prev2, z_prev1 = z_prev1, z
    xg = xg_ref[...]                                              # (N, K*TB*I)

    # Per-node weights / bias (batch-invariant, precomputed in prologue).
    w_flat = wb_ref[:, :KIO]                                      # (N, K*I*O)
    bias = wb_ref[:, KIO:]                                        # (N, O)
    w_exp = jnp.tile(w_flat, (1, TB))                             # (N, TB*K*I*O)
    bias_exp = jnp.tile(bias, (1, TB))                            # (N, TB*O)

    # (k, i) contraction via constant expand / group-reduce matrices:
    #   xg_exp[n, q] = xg[n, (k,b,i)(q)]  ;  out[n, b*O+o] = sum_{k,i} prod
    xg_exp = jnp.dot(xg, exp_ref[...],
                     preferred_element_type=jnp.float32)          # (N, TB*K*I*O)
    prod = xg_exp * w_exp                                         # (N, TB*K*I*O)
    out = jnp.dot(prod, red_ref[...],
                  preferred_element_type=jnp.float32) + bias_exp  # (N, TB*O)

    out_ref[...] = out                                            # lane-dense store


def _build_expand_reduce(K, TB, I, O):
    """Constant 0/1 matrices for the per-node (k, i) contraction.

    q index ordering (lanes of the expanded product): q = b*K*I*O + k*I*O + i*O + o.
    xg lane ordering: c = k*TB*I + b*I + i.
    """
    KIO = K * I * O
    rows = jnp.arange(K * TB * I)
    k_r = rows // (TB * I)
    b_r = (rows % (TB * I)) // I
    i_r = rows % I

    cols = jnp.arange(TB * KIO)
    b_c = cols // KIO
    k_c = (cols % KIO) // (I * O)
    i_c = (cols % (I * O)) // O
    o_c = cols % O

    expand = ((k_r[:, None] == k_c[None, :]) &
              (b_r[:, None] == b_c[None, :]) &
              (i_r[:, None] == i_c[None, :])).astype(jnp.float32)  # (K*TB*I, TB*K*I*O)

    out_col = b_c * O + o_c
    reduce_m = (out_col[:, None] ==
                jnp.arange(TB * O)[None, :]).astype(jnp.float32)   # (TB*K*I*O, TB*O)
    return expand, reduce_m


def avwgcnt_forward(x, node_embeddings, ln_weight, ln_bias, weights_pool, bias_pool,
                    cheb_k, batch_tile=None):
    """x: (B, N, dim_in); node_embeddings: (N, embed_dim). Returns (B, N, dim_out)."""
    B, N, I = x.shape
    D = node_embeddings.shape[1]
    O = bias_pool.shape[1]
    K = cheb_k
    assert K >= 2, "AVWGCNT requires cheb_k >= 2 (support set starts as [I, S])"

    TB = B if batch_tile is None else batch_tile
    assert B % TB == 0
    # Block (8,128) rule: a sub-full batch tile needs 128-multiple lane widths.
    assert TB == B or ((TB * I) % 128 == 0 and (TB * O) % 128 == 0)

    KIO = K * I * O
    pool_cat = jnp.concatenate([weights_pool.reshape(D, KIO), bias_pool], axis=1)
    lnw = ln_weight.reshape(1, D)
    lnb = ln_bias.reshape(1, D)

    # ---- prologue: batch-invariant supports + per-node weights/bias --------
    s1, wb = pl.pallas_call(
        _prologue_kernel,
        out_shape=(jax.ShapeDtypeStruct((N, N), jnp.float32),
                   jax.ShapeDtypeStruct((N, KIO + O), jnp.float32)),
        grid=(1,),
        in_specs=[
            pl.BlockSpec((N, D), lambda i: (0, 0)),               # node_embeddings
            pl.BlockSpec((1, D), lambda i: (0, 0)),               # layernorm weight
            pl.BlockSpec((1, D), lambda i: (0, 0)),               # layernorm bias
            pl.BlockSpec((D, KIO + O), lambda i: (0, 0)),         # fused pools
        ],
        out_specs=(pl.BlockSpec((N, N), lambda i: (0, 0)),
                   pl.BlockSpec((N, KIO + O), lambda i: (0, 0))),
        compiler_params=pltpu.CompilerParams(
            dimension_semantics=("arbitrary",)),
    )(node_embeddings, lnw, lnb, pool_cat)

    # ---- fold batch into lanes; constant contraction matrices --------------
    xt = jnp.transpose(x, (1, 0, 2)).reshape(N, B * I)            # (N, B*I)
    expand, reduce_m = _build_expand_reduce(K, TB, I, O)

    kernel = functools.partial(_gconv_kernel, I=I, O=O, K=K, TB=TB)
    out_t = pl.pallas_call(
        kernel,
        out_shape=jax.ShapeDtypeStruct((N, B * O), jnp.float32),
        grid=(B // TB,),
        in_specs=[
            pl.BlockSpec((N, N), lambda t: (0, 0)),               # supports S_1
            pl.BlockSpec((N, KIO + O), lambda t: (0, 0)),         # [w_flat | bias]
            pl.BlockSpec((K * TB * I, TB * KIO), lambda t: (0, 0)),   # expand
            pl.BlockSpec((TB * KIO, TB * O), lambda t: (0, 0)),   # group-reduce
            pl.BlockSpec((N, TB * I), lambda t: (0, t)),          # x batch tile
        ],
        out_specs=pl.BlockSpec((N, TB * O), lambda t: (0, t)),
        scratch_shapes=[pltpu.VMEM((N, K * TB * I), jnp.float32)],
        compiler_params=pltpu.CompilerParams(
            dimension_semantics=("parallel",)),
    )(s1, wb, expand, reduce_m, xt)

    # (N, B*O) lane-dense slab -> (B, N, O)
    return out_t.reshape(N, B, O).transpose(1, 0, 2)


def avwgcnt_reference(x, node_embeddings, ln_weight, ln_bias, weights_pool, bias_pool,
                      cheb_k):
    """Pure-JAX reference mirroring the PyTorch forward (mask=None, eval mode)."""
    N = node_embeddings.shape[0]
    mean = node_embeddings.mean(-1, keepdims=True)
    var = ((node_embeddings - mean) ** 2).mean(-1, keepdims=True)
    e = (node_embeddings - mean) / jnp.sqrt(var + 1e-12) * ln_weight + ln_bias
    logits = e @ e.T
    elu = jnp.where(logits > 0.0, logits, jnp.exp(jnp.minimum(logits, 0.0)) - 1.0)
    s1 = jax.nn.softmax(elu, axis=0)
    ss = [jnp.eye(N, dtype=jnp.float32), s1]
    for _k in range(2, cheb_k):
        ss.append(2.0 * s1 @ ss[-1] - ss[-2])
    supports = jnp.stack(ss, axis=0)                              # (K, N, N)
    weights = jnp.einsum('nd,dkio->nkio', e, weights_pool)        # (N, K, I, O)
    bias = e @ bias_pool                                          # (N, O)
    x_g = jnp.einsum('knm,bmc->bknc', supports, x)                # (B, K, N, I)
    x_g = x_g.transpose(0, 2, 1, 3)                               # (B, N, K, I)
    return jnp.einsum('bnki,nkio->bno', x_g, weights) + bias


if __name__ == "__main__":
    # Small shapes consistent with the module.
    B, N = 2, 16          # batch, num_node
    D = 8                 # embed_dim
    I, O = 4, 4           # dim_in, dim_out
    K = 3                 # cheb_k

    key = jax.random.PRNGKey(0)
    k_x, k_e, k_w, k_b = jax.random.split(key, 4)

    x = jax.random.normal(k_x, (B, N, I), dtype=jnp.float32)
    node_embeddings = jax.random.normal(k_e, (N, D), dtype=jnp.float32)

    # Parameters (deterministic synthetic init; torch.FloatTensor is uninitialized).
    weights_pool = 0.1 * jax.random.normal(k_w, (D, K, I, O), dtype=jnp.float32)
    bias_pool = 0.1 * jax.random.normal(k_b, (D, O), dtype=jnp.float32)
    ln_weight = jnp.ones((D,), dtype=jnp.float32)    # nn.LayerNorm default init
    ln_bias = jnp.zeros((D,), dtype=jnp.float32)

    out = avwgcnt_forward(x, node_embeddings, ln_weight, ln_bias,
                          weights_pool, bias_pool, K)
    out = jax.block_until_ready(out)

    ref = avwgcnt_reference(x, node_embeddings, ln_weight, ln_bias,
                            weights_pool, bias_pool, K)
    assert out.shape == (B, N, O)
    # Exact softmax divide + f32 MXU accumulation: tight tolerance again.
    assert jnp.allclose(out, ref, rtol=2e-4, atol=2e-4), "mismatch vs reference"

    print("KERNEL_OK")
</pallas_src>

<mosaic_0001>
module attributes {stable_mosaic.version = 11 : i64} {
  func.func @_prologue_kernel(%arg0: i32, %arg1: memref<16x8xf32, #tpu.memory_space<vmem>>, %arg2: memref<1x8xf32, #tpu.memory_space<vmem>>, %arg3: memref<1x8xf32, #tpu.memory_space<vmem>>, %arg4: memref<8x52xf32, #tpu.memory_space<vmem>>, %arg5: memref<16x16xf32, #tpu.memory_space<vmem>>, %arg6: memref<16x52xf32, #tpu.memory_space<vmem>>) attributes {dimension_semantics = [#tpu.dimension_semantics<arbitrary>], iteration_bounds = array<i64: 1>, scalar_prefetch = 0 : i64, scratch_operands = 0 : i64, tpu.core_type = #tpu.core_type<tc>, window_params = [{pipeline_mode = #tpu.pipeline_mode<synchronous>, transform_indices = @transform_0, window_bounds = array<i64: 16, 8>}, {pipeline_mode = #tpu.pipeline_mode<synchronous>, transform_indices = @transform_1, window_bounds = array<i64: 1, 8>}, {pipeline_mode = #tpu.pipeline_mode<synchronous>, transform_indices = @transform_2, window_bounds = array<i64: 1, 8>}, {pipeline_mode = #tpu.pipeline_mode<synchronous>, transform_indices = @transform_3, window_bounds = array<i64: 8, 52>}, {pipeline_mode = #tpu.pipeline_mode<synchronous>, transform_indices = @transform_4, window_bounds = array<i64: 16, 16>}, {pipeline_mode = #tpu.pipeline_mode<synchronous>, transform_indices = @transform_5, window_bounds = array<i64: 16, 52>}]} {
    %c0 = arith.constant 0 : index
    %c0_0 = arith.constant 0 : index
    %0 = vector.load %arg1[%c0, %c0_0] : memref<16x8xf32, #tpu.memory_space<vmem>>, vector<16x8xf32>
    %cst = arith.constant dense<0.000000e+00> : vector<16xf32>
    %1 = vector.multi_reduction <add>, %0, %cst [1] : vector<16x8xf32> to vector<16xf32>
    %2 = vector.shape_cast %1 : vector<16xf32> to vector<16x1xf32>
    %cst_1 = arith.constant 8.000000e+00 : f32
    %3 = vector.broadcast %cst_1 : f32 to vector<16x1xf32>
    %4 = arith.divf %2, %3 : vector<16x1xf32>
    %5 = vector.broadcast %4 : vector<16x1xf32> to vector<16x8xf32>
    %6 = arith.subf %0, %5 : vector<16x8xf32>
    %7 = arith.mulf %6, %6 : vector<16x8xf32>
    %cst_2 = arith.constant dense<0.000000e+00> : vector<16xf32>
    %8 = vector.multi_reduction <add>, %7, %cst_2 [1] : vector<16x8xf32> to vector<16xf32>
    %9 = vector.shape_cast %8 : vector<16xf32> to vector<16x1xf32>
    %cst_3 = arith.constant 8.000000e+00 : f32
    %10 = vector.broadcast %cst_3 : f32 to vector<16x1xf32>
    %11 = arith.divf %9, %10 : vector<16x1xf32>
    %cst_4 = arith.constant 9.99999996E-13 : f32
    %12 = vector.broadcast %cst_4 : f32 to vector<16x1xf32>
    %13 = arith.addf %11, %12 : vector<16x1xf32>
    %14 = math.rsqrt %13 : vector<16x1xf32>
    %15 = vector.broadcast %14 : vector<16x1xf32> to vector<16x8xf32>
    %16 = arith.mulf %6, %15 : vector<16x8xf32>
    %c0_5 = arith.constant 0 : index
    %c0_6 = arith.constant 0 : index
    %17 = vector.load %arg2[%c0_5, %c0_6] : memref<1x8xf32, #tpu.memory_space<vmem>>, vector<1x8xf32>
    %18 = vector.broadcast %17 : vector<1x8xf32> to vector<16x8xf32>
    %19 = arith.mulf %16, %18 : vector<16x8xf32>
    %c0_7 = arith.constant 0 : index
    %c0_8 = arith.constant 0 : index
    %20 = vector.load %arg3[%c0_7, %c0_8] : memref<1x8xf32, #tpu.memory_space<vmem>>, vector<1x8xf32>
    %21 = vector.broadcast %20 : vector<1x8xf32> to vector<16x8xf32>
    %22 = arith.addf %19, %21 : vector<16x8xf32>
    %cst_9 = arith.constant dense<0.000000e+00> : vector<16x16xf32>
    %23 = tpu.matmul %22, %22, %cst_9 {dimension_numbers = #tpu.dot_dimension_numbers<[1], [1], [0], [0], [0, 0, 1, 0], [], []>} : vector<16x8xf32>, vector<16x8xf32>, vector<16x16xf32> -> vector<16x16xf32>
    %cst_10 = arith.constant 0.000000e+00 : f32
    %24 = vector.broadcast %cst_10 : f32 to vector<16x16xf32>
    %25 = arith.cmpf ogt, %23, %24 : vector<16x16xf32>
    %cst_11 = arith.constant 0.000000e+00 : f32
    %26 = vector.broadcast %cst_11 : f32 to vector<16x16xf32>
    %27 = arith.minimumf %23, %26 : vector<16x16xf32>
    %28 = math.exp %27 : vector<16x16xf32>
    %cst_12 = arith.constant 1.000000e+00 : f32
    %29 = vector.broadcast %cst_12 : f32 to vector<16x16xf32>
    %30 = arith.subf %28, %29 : vector<16x16xf32>
    %31 = arith.select %25, %23, %30 : vector<16x16xi1>, vector<16x16xf32>
    %cst_13 = arith.constant dense<0xFF800000> : vector<16xf32>
    %32 = vector.multi_reduction <maximumf>, %31, %cst_13 [0] : vector<16x16xf32> to vector<16xf32>
    %33 = vector.shape_cast %32 : vector<16xf32> to vector<1x16xf32>
    %34 = vector.broadcast %33 : vector<1x16xf32> to vector<16x16xf32>
    %35 = arith.subf %31, %34 : vector<16x16xf32>
    %36 = math.exp %35 : vector<16x16xf32>
    %cst_14 = arith.constant dense<0.000000e+00> : vector<16xf32>
    %37 = vector.multi_reduction <add>, %36, %cst_14 [0] : vector<16x16xf32> to vector<16xf32>
    %38 = vector.shape_cast %37 : vector<16xf32> to vector<1x16xf32>
    %39 = vector.broadcast %38 : vector<1x16xf32> to vector<16x16xf32>
    %40 = arith.divf %36, %39 : vector<16x16xf32>
    %c0_15 = arith.constant 0 : index
    %c0_16 = arith.constant 0 : index
    %41 = vector.load %arg5[%c0_15, %c0_16] : memref<16x16xf32, #tpu.memory_space<vmem>>, vector<16x16xf32>
    tpu.vector_store %arg5[%c0_15, %c0_16], %40 {strides = array<i32>} : memref<16x16xf32, #tpu.memory_space<vmem>>, vector<16x16xf32>,
    %c0_17 = arith.constant 0 : index
    %c0_18 = arith.constant 0 : index
    %42 = vector.load %arg4[%c0_17, %c0_18] : memref<8x52xf32, #tpu.memory_space<vmem>>, vector<8x52xf32>
    %cst_19 = arith.constant dense<0.000000e+00> : vector<16x52xf32>
    %43 = tpu.matmul %22, %42, %cst_19 {dimension_numbers = #tpu.dot_dimension_numbers<[1], [0], [0], [1], [0, 0, 1, 1], [], []>} : vector<16x8xf32>, vector<8x52xf32>, vector<16x52xf32> -> vector<16x52xf32>
    %c0_20 = arith.constant 0 : index
    %c0_21 = arith.constant 0 : index
    %44 = vector.load %arg6[%c0_20, %c0_21] : memref<16x52xf32, #tpu.memory_space<vmem>>, vector<16x52xf32>
    tpu.vector_store %arg6[%c0_20, %c0_21], %43 {strides = array<i32>} : memref<16x52xf32, #tpu.memory_space<vmem>>, vector<16x52xf32>,
    return
  }
  func.func @transform_0(%arg0: i32) -> (i32, i32) {
    %c0_i32 = arith.constant 0 : i32
    %c0_i32_0 = arith.constant 0 : i32
    %c0_i32_1 = arith.constant 0 : i32
    return %c0_i32, %c0_i32_0 : i32, i32
  }
  func.func @transform_1(%arg0: i32) -> (i32, i32) {
    %c0_i32 = arith.constant 0 : i32
    %c0_i32_0 = arith.constant 0 : i32
    %c0_i32_1 = arith.constant 0 : i32
    return %c0_i32, %c0_i32_0 : i32, i32
  }
  func.func @transform_2(%arg0: i32) -> (i32, i32) {
    %c0_i32 = arith.constant 0 : i32
    %c0_i32_0 = arith.constant 0 : i32
    %c0_i32_1 = arith.constant 0 : i32
    return %c0_i32, %c0_i32_0 : i32, i32
  }
  func.func @transform_3(%arg0: i32) -> (i32, i32) {
    %c0_i32 = arith.constant 0 : i32
    %c0_i32_0 = arith.constant 0 : i32
    %c0_i32_1 = arith.constant 0 : i32
    return %c0_i32, %c0_i32_0 : i32, i32
  }
  func.func @transform_4(%arg0: i32) -> (i32, i32) {
    %c0_i32 = arith.constant 0 : i32
    %c0_i32_0 = arith.constant 0 : i32
    %c0_i32_1 = arith.constant 0 : i32
    return %c0_i32, %c0_i32_0 : i32, i32
  }
  func.func @transform_5(%arg0: i32) -> (i32, i32) {
    %c0_i32 = arith.constant 0 : i32
    %c0_i32_0 = arith.constant 0 : i32
    %c0_i32_1 = arith.constant 0 : i32
    return %c0_i32, %c0_i32_0 : i32, i32
  }
}

</mosaic_0001>

<llo_original>
// kernel: tpu_custom_call.1
$region0: #{tpu_custom_call.1}
  #allocation0 [shape = 'u32[]', space=smem, size = 0x4, offset = 0x4, fixed_abs, tag = 'smem constant byte address 0x4 - core index']
  #allocation1 [shape = 'u32[144,128]{1,0:T(1,128)}', space=vmem, size = 0x12000, scoped, tag = 'internal scratch']
  %s0 = inlined_call_operand.vmem [shape: f32[16,8], index: 0, kind: input, shape index: {}]
  %s1 = inlined_call_operand.vmem [shape: f32[1,8], index: 1, kind: input, shape index: {}]
  %s2 = inlined_call_operand.vmem [shape: f32[1,8], index: 2, kind: input, shape index: {}]
  %s3 = inlined_call_operand.vmem [shape: f32[8,52], index: 3, kind: input, shape index: {}]
  %s4 = inlined_call_operand.hbm [shape: f32[16,16], index: 4, kind: output, shape index: {0}]
  %s5 = inlined_call_operand.hbm [shape: f32[16,52], index: 5, kind: output, shape index: {1}]
  %6 = xla_tuple %s4, %s5
  %s7 = sld [smem:[#allocation0]]
  $region34: #{tpu_custom_call.1} parent=0
    _
  %s9 = ssub.s32 1, %s7
  %s10 = scalar_select 0, %s9, %s7
  $region1: #{tpu_custom_call.1} parent=0
    #allocation2 [shape = 'u8[8192]{0}', space=vmem, size = 0x2000, scoped, tag = 'output window, operand 0, single buffered']
    #allocation3 [shape = 's32[1]{0}', space=sflag, size = 0x4, scoped, tag = 'scoped memory for tpu_custom_call.1']
    #allocation4 [shape = 'u8[8192]{0}', space=vmem, size = 0x2000, scoped, tag = 'output window, operand 1, single buffered']
    #allocation5 [shape = 's32[1]{0}', space=sflag, size = 0x4, scoped, tag = 'scoped memory for tpu_custom_call.1']
    %11 = vsyncpa [#allocation3], 0
    %12 = vsyncpa [#allocation5], 0
    // Predicated region
    $region2: #{tpu_custom_call.1} parent=1 // pred_check
      _
    $region3: #{tpu_custom_call.1} parent=1 // pred_check_branch
      %14 = sbr.rel (0) target = $region5
    $region4: #{tpu_custom_call.1} parent=1 // pred_region
      _
    $region5: #{tpu_custom_call.1} parent=1 // pred_fallthru
      _
    // Predicated region
    $region6: #{tpu_custom_call.1} parent=1 // pred_check
      _
    $region7: #{tpu_custom_call.1} parent=1 // pred_check_branch
      %16 = sbr.rel (0) target = $region9
    $region8: #{tpu_custom_call.1} parent=1 // pred_region
      _
    $region9: #{tpu_custom_call.1} parent=1 // pred_fallthru
      _
    // Predicated region
    $region10: #{tpu_custom_call.1} parent=1 // pred_check
      _
    $region11: #{tpu_custom_call.1} parent=1 // pred_check_branch
      %18 = sbr.rel (0) target = $region13
    $region12: #{tpu_custom_call.1} parent=1 // pred_region
      _
    $region13: #{tpu_custom_call.1} parent=1 // pred_fallthru
      _
    // Predicated region
    $region14: #{tpu_custom_call.1} parent=1 // pred_check
      _
    $region15: #{tpu_custom_call.1} parent=1 // pred_check_branch
      %20 = sbr.rel (0) target = $region17
    $region16: #{tpu_custom_call.1} parent=1 // pred_region
      _
    $region17: #{tpu_custom_call.1} parent=1 // pred_fallthru
      _
    %v21 = vld [vmem:[%s0] sm:$0xff]
    %v22 = vld [vmem:[%s0 + $0x8] sm:$0xff]
    %vm23 = vcmask 64512
    %v24 = vsel %vm23, %v21, 0.0
    %25 = vadd.xlane.f32.xlu0 %v24
    %v26 = vpop.xlane.xlu0 %25
    %v27 = vsel %vm23, %v22, 0.0
    %28 = vadd.xlane.f32.xlu0 %v27
    %v29 = vpop.xlane.xlu0 %28
    %v30 = vrcp.pop 8.0
    %v31 = vmul.f32 %v26, %v30
    %v32 = vmul.f32 %v29, %v30
    %v33 = vsub.f32 %v21, %v31
    %v34 = vsub.f32 %v22, %v32
    %v35 = vmul.f32 %v33, %v33
    %v36 = vmul.f32 %v34, %v34
    %v37 = vsel %vm23, %v35, 0.0
    %38 = vadd.xlane.f32.xlu0 %v37
    %v39 = vpop.xlane.xlu0 %38
    %v40 = vsel %vm23, %v36, 0.0
    %41 = vadd.xlane.f32.xlu0 %v40
    %v42 = vpop.xlane.xlu0 %41
    %v43 = vmul.f32 %v39, %v30
    %v44 = vmul.f32 %v42, %v30
    %v45 = vadd.f32 %v43, 1e-12
    %v46 = vadd.f32 %v44, 1e-12
    %v47 = vrsqrt.pop %v45
    %v48 = vrsqrt.pop %v46
    %v49 = vmul.f32 %v33, %v47
    %v50 = vmul.f32 %v34, %v48
    %v51 = vld [vmem:[%s1] sm:$0x1]
    %v53 = vlaneseq
    %v54 = vshrl.u32 %v53, 7
    %v55 = vsub.s32 0, %v54
    %v56 = vrot.slane %v51, %v55
    %v58 = vmul.f32 %v49, %v56
    %v59 = vmul.f32 %v50, %v56
    %v60 = vld [vmem:[%s2] sm:$0x1]
    %v62 = vlaneseq
    %v63 = vshrl.u32 %v62, 7
    %v64 = vsub.s32 0, %v63
    %v65 = vrot.slane %v60, %v64
    %v67 = vadd.f32 %v58, %v65
    %v68 = vadd.f32 %v59, %v65
    %v70 = vsel %vm23, %v67, 0
    %v73 = vsel %vm23, %v68, 0
    %75 = vmatprep.subr.mxu0 0.0
    %76 = vmatpush1.xpose.msra.mxu0 0.0
    %77 = vmatprep.subr.mxu0 0.0
    %78 = vmatpush1.xpose.msra.mxu0 0.0
    %79 = vmatprep.subr.mxu0 0.0
    %80 = vmatpush1.xpose.msra.mxu0 0.0
    %81 = vmatprep.subr.mxu0 0.0
    %82 = vmatpush1.xpose.msra.mxu0 0.0
    %83 = vmatprep.subr.mxu0 0.0
    %84 = vmatpush1.xpose.msra.mxu0 0.0
    %85 = vmatprep.subr.mxu0 0.0
    %86 = vmatpush1.xpose.msra.mxu0 0.0
    %87 = vmatprep.subr.mxu0 0.0
    %88 = vmatpush1.xpose.msra.mxu0 0.0
    %89 = vmatprep.subr.mxu0 0.0
    %90 = vmatpush1.xpose.msra.mxu0 0.0
    %91 = vmatprep.subr.mxu0 0.0
    %92 = vmatpush1.xpose.msra.mxu0 0.0
    %93 = vmatprep.subr.mxu0 0.0
    %94 = vmatpush1.xpose.msra.mxu0 0.0
    %95 = vmatprep.subr.mxu0 0.0
    %96 = vmatpush1.xpose.msra.mxu0 0.0
    %97 = vmatprep.subr.mxu0 0.0
    %98 = vmatpush1.xpose.msra.mxu0 0.0
    %99 = vmatprep.subr.mxu0 0.0
    %100 = vmatpush1.xpose.msra.mxu0 0.0
    %101 = vmatprep.subr.mxu0 0.0
    %102 = vmatpush1.xpose.msra.mxu0 0.0
    %103 = vmatprep.subr.mxu0 0.0
    %104 = vmatpush1.xpose.msra.mxu0 %v73
    %105 = vmatprep.subr.mxu0 0.0
    %106 = vmatpush1.xpose.msra.mxu0 %v70
    %107 = vmatprep.subr.mxu0 0.0
    %108 = vmatpush2.xpose.msra.mxu0 0.0
    %109 = vmatprep.subr.mxu0 0.0
    %110 = vmatpush2.xpose.msra.mxu0 0.0
    %111 = vmatprep.subr.mxu0 0.0
    %112 = vmatpush2.xpose.msra.mxu0 0.0
    %113 = vmatprep.subr.mxu0 0.0
    %114 = vmatpush2.xpose.msra.mxu0 0.0
    %115 = vmatprep.subr.mxu0 0.0
    %116 = vmatpush2.xpose.msra.mxu0 0.0
    %117 = vmatprep.subr.mxu0 0.0
    %118 = vmatpush2.xpose.msra.mxu0 0.0
    %119 = vmatprep.subr.mxu0 0.0
    %120 = vmatpush2.xpose.msra.mxu0 0.0
    %121 = vmatprep.subr.mxu0 0.0
    %122 = vmatpush2.xpose.msra.mxu0 0.0
    %123 = vmatprep.subr.mxu0 0.0
    %124 = vmatpush2.xpose.msra.mxu0 0.0
    %125 = vmatprep.subr.mxu0 0.0
    %126 = vmatpush2.xpose.msra.mxu0 0.0
    %127 = vmatprep.subr.mxu0 0.0
    %128 = vmatpush2.xpose.msra.mxu0 0.0
    %129 = vmatprep.subr.mxu0 0.0
    %130 = vmatpush2.xpose.msra.mxu0 0.0
    %131 = vmatprep.subr.mxu0 0.0
    %132 = vmatpush2.xpose.msra.mxu0 0.0
    %133 = vmatprep.subr.mxu0 0.0
    %134 = vmatpush2.xpose.msra.mxu0 0.0
    %135 = vmatprep.subr.mxu0 0.0
    %136 = vmatpush2.xpose.msra.mxu0 0.0
    %137 = vmatprep.subr.mxu0 0.0
    %138 = vmatpush2.xpose.msra.mxu0 0.0
    %139 = vmatprep.mubr.f32.mxu0 0.0
    %140 = vmatmul.mubr.f32.gmra.mxu0 %v70
    %v141 = vpop.f32.mrf.mxu0
    %v142 = vadd.f32 0.0, %v141
    %v143 = vpop.f32.mrf.mxu0
    %144 = vmatprep.mubr.f32.mxu0 0.0
    %145 = vmatmul.mubr.f32.gmra.mxu0 %v73
    %v146 = vpop.f32.mrf.mxu0
    %v147 = vadd.f32 0.0, %v146
    %v148 = vpop.f32.mrf.mxu0
    %149 = vdwg.mxu0
    %vm150 = vcmp.gt.f32.partialorder %v142, 0.0
    %vm151 = vcmp.gt.f32.partialorder %v147, 0.0
    %v152 = vmin.f32 %v142, 0.0
    %v153 = vmin.f32 %v147, 0.0
    %v154 = vmul.f32 %v152, 1.442695
    %v155 = vpow.pop %v154
    %v156 = vmul.f32 %v153, 1.442695
    %v157 = vpow.pop %v156
    %v158 = vsub.f32 %v155, 1.0
    %v159 = vsub.f32 %v157, 1.0
    %v160 = vsel %vm150, %v142, %v158
    %v161 = vsel %vm151, %v147, %v159
    %vm162 = vcmask 130048
    %v163 = vsel %vm162, %v160, -inf
    %v164 = vsel %vm162, %v161, -inf
    %v165 = vmax.f32 %v163, %v164
    %v166 = vrot.slane %v165, 4
    %v167 = vmax.f32 %v165, %v166
    %v168 = vrot.slane %v167, 2
    %v169 = vmax.f32 %v167, %v168
    %v170 = vrot.slane %v169, 1
    %v171 = vmax.f32 %v169, %v170
    %v172 = vsub.f32 %v160, %v171
    %v173 = vsub.f32 %v161, %v171
    %v174 = vmul.f32 %v172, 1.442695
    %v175 = vpow.pop %v174
    %v176 = vmul.f32 %v173, 1.442695
    %v177 = vpow.pop %v176
    %v178 = vsel %vm162, %v175, 0.0
    %v179 = vsel %vm162, %v177, 0.0
    %v180 = vadd.f32 %v178, %v179
    %v181 = vrot.slane %v180, 4
    %v182 = vadd.f32 %v180, %v181
    %v183 = vrot.slane %v182, 2
    %v184 = vadd.f32 %v182, %v183
    %v185 = vrot.slane %v184, 1
    %v186 = vadd.f32 %v184, %v185
    %v187 = vrcp.pop %v186
    %v188 = vmul.f32 %v175, %v187
    %v189 = vmul.f32 %v177, %v187
    %190 = vst.msk [vmem:[#allocation2] sm:$0xff] %vm162, %v188
    %191 = vst.msk [vmem:[#allocation2 + $0x8] sm:$0xff] %vm162, %v189
    %v192 = vld [vmem:[%s3] sm:$0xff]
    %193 = vmatprep.subr.mxu0 0.0
    %194 = vmatpush1.msra.mxu0 0.0
    %195 = vmatprep.subr.mxu0 0.0
    %196 = vmatpush1.msra.mxu0 0.0
    %197 = vmatprep.subr.mxu0 0.0
    %198 = vmatpush1.msra.mxu0 0.0
    %199 = vmatprep.subr.mxu0 0.0
    %200 = vmatpush1.msra.mxu0 0.0
    %201 = vmatprep.subr.mxu0 0.0
    %202 = vmatpush1.msra.mxu0 0.0
    %203 = vmatprep.subr.mxu0 0.0
    %204 = vmatpush1.msra.mxu0 0.0
    %205 = vmatprep.subr.mxu0 0.0
    %206 = vmatpush1.msra.mxu0 0.0
    %207 = vmatprep.subr.mxu0 0.0
    %208 = vmatpush1.msra.mxu0 0.0
    %209 = vmatprep.subr.mxu0 0.0
    %210 = vmatpush1.msra.mxu0 0.0
    %211 = vmatprep.subr.mxu0 0.0
    %212 = vmatpush1.msra.mxu0 0.0
    %213 = vmatprep.subr.mxu0 0.0
    %214 = vmatpush1.msra.mxu0 0.0
    %215 = vmatprep.subr.mxu0 0.0
    %216 = vmatpush1.msra.mxu0 0.0
    %217 = vmatprep.subr.mxu0 0.0
    %218 = vmatpush1.msra.mxu0 0.0
    %219 = vmatprep.subr.mxu0 0.0
    %220 = vmatpush1.msra.mxu0 0.0
    %221 = vmatprep.subr.mxu0 0.0
    %222 = vmatpush1.msra.mxu0 0.0
    %223 = vmatprep.subr.mxu0 0.0
    %224 = vmatpush1.msra.mxu0 %v192
    %225 = vmatprep.subr.mxu0 0.0
    %226 = vmatpush2.msra.mxu0 0.0
    %227 = vmatprep.subr.mxu0 0.0
    %228 = vmatpush2.msra.mxu0 0.0
    %229 = vmatprep.subr.mxu0 0.0
    %230 = vmatpush2.msra.mxu0 0.0
    %231 = vmatprep.subr.mxu0 0.0
    %232 = vmatpush2.msra.mxu0 0.0
    %233 = vmatprep.subr.mxu0 0.0
    %234 = vmatpush2.msra.mxu0 0.0
    %235 = vmatprep.subr.mxu0 0.0
    %236 = vmatpush2.msra.mxu0 0.0
    %237 = vmatprep.subr.mxu0 0.0
    %238 = vmatpush2.msra.mxu0 0.0
    %239 = vmatprep.subr.mxu0 0.0
    %240 = vmatpush2.msra.mxu0 0.0
    %241 = vmatprep.subr.mxu0 0.0
    %242 = vmatpush2.msra.mxu0 0.0
    %243 = vmatprep.subr.mxu0 0.0
    %244 = vmatpush2.msra.mxu0 0.0
    %245 = vmatprep.subr.mxu0 0.0
    %246 = vmatpush2.msra.mxu0 0.0
    %247 = vmatprep.subr.mxu0 0.0
    %248 = vmatpush2.msra.mxu0 0.0
    %249 = vmatprep.subr.mxu0 0.0
    %250 = vmatpush2.msra.mxu0 0.0
    %251 = vmatprep.subr.mxu0 0.0
    %252 = vmatpush2.msra.mxu0 0.0
    %253 = vmatprep.subr.mxu0 0.0
    %254 = vmatpush2.msra.mxu0 0.0
    %255 = vmatprep.subr.mxu0 0.0
    %256 = vmatpush2.msra.mxu0 0.0
    %257 = vmatprep.mubr.f32.mxu0 0.0
    %258 = vmatmul.mubr.f32.gmra.mxu0 %v70
    %v259 = vpop.f32.mrf.mxu0
    %v260 = vadd.f32 0.0, %v259
    %v261 = vpop.f32.mrf.mxu0
    %262 = vmatprep.mubr.f32.mxu0 0.0
    %263 = vmatmul.mubr.f32.gmra.mxu0 %v73
    %v264 = vpop.f32.mrf.mxu0
    %v265 = vadd.f32 0.0, %v264
    %v266 = vpop.f32.mrf.mxu0
    %267 = vdwg.mxu0
    %vm268 = vcmask 424960
    %269 = vst.msk [vmem:[#allocation4] sm:$0xff] %vm268, %v260
    %270 = vst.msk [vmem:[#allocation4 + $0x8] sm:$0xff] %vm268, %v265
    // Predicated region
    $region18: #{tpu_custom_call.1} parent=1 // pred_check
      _
    $region19: #{tpu_custom_call.1} parent=1 // pred_check_branch
      %272 = sbr.rel (0) target = $region21
    $region20: #{tpu_custom_call.1} parent=1 // pred_region
      %s274 = ssub.s32 256, 256
      %275 = vsyncadd [#allocation3], %s274
      %s276 = sshll.u32 [#allocation2], 4
      %s277 = int_to_ptr.vmem [resolvable:$true] %s276
      %282 = dma.vmem_to_hbm [thread:$0]  %s277, 256, %s4, [#allocation3], 128, 128, 8
    $region21: #{tpu_custom_call.1} parent=1 // pred_fallthru
      _
    // Predicated region
    $region22: #{tpu_custom_call.1} parent=1 // pred_check
      _
    $region23: #{tpu_custom_call.1} parent=1 // pred_check_branch
      %284 = sbr.rel (0) target = $region25
    $region24: #{tpu_custom_call.1} parent=1 // pred_region
      %s286 = ssub.s32 256, 256
      %287 = vsyncadd [#allocation5], %s286
      %s288 = sshll.u32 [#allocation4], 4
      %s289 = int_to_ptr.vmem [resolvable:$true] %s288
      %294 = dma.vmem_to_hbm [thread:$0]  %s289, 256, %s5, [#allocation5], 128, 128, 8
    $region25: #{tpu_custom_call.1} parent=1 // pred_fallthru
      _
    // Predicated region
    $region26: #{tpu_custom_call.1} parent=1 // pred_check
      _
    $region27: #{tpu_custom_call.1} parent=1 // pred_check_branch
      %296 = sbr.rel (0) target = $region29
    $region28: #{tpu_custom_call.1} parent=1 // pred_region
      %297 = dma.done [#allocation3], 256
    $region29: #{tpu_custom_call.1} parent=1 // pred_fallthru
      _
    // Predicated region
    $region30: #{tpu_custom_call.1} parent=1 // pred_check
      _
    $region31: #{tpu_custom_call.1} parent=1 // pred_check_branch
      %299 = sbr.rel (0) target = $region33
    $region32: #{tpu_custom_call.1} parent=1 // pred_region
      %300 = dma.done [#allocation5], 256
    $region33: #{tpu_custom_call.1} parent=1 // pred_fallthru
      _
    %301 = vsyncpa [#allocation3], 1
    %302 = vsyncpa [#allocation5], 1

</llo_original>
